<compile_context>
chip_gen: v7x
topology: tpu7x:2x2x1
jax: 0.10.0
libtpu: 0.0.40
codegen_flags: <defaults>
</compile_context>

<pallas_src>
import functools

import jax
import jax.numpy as jnp
from jax.experimental import pallas as pl
from jax.experimental.pallas import tpu as pltpu

OUT_LANES = 128  # lane-dense packed output width (probs in [0, A), value at A)


def _ac_fused_kernel(x_ref, wh_ref, bh_ref, wo_ref, bo_ref, out_ref, *,
                     num_actions):
    # Fused hidden layer for both heads: h = relu(x @ [p_h2_w | v_h2_w] + b)
    h = jnp.dot(x_ref[...], wh_ref[...],
                preferred_element_type=jnp.float32) + bh_ref[...]
    h = jnp.maximum(h, 0.0)

    # Fused block-diagonal output layer (lane-padded to OUT_LANES):
    #   o[:, :A]  = policy logits
    #   o[:,  A]  = value
    #   o[:, A+1:] = 0
    o = jnp.dot(h.astype(jnp.bfloat16), wo_ref[...],
                preferred_element_type=jnp.float32) + bo_ref[...]

    lane = jax.lax.broadcasted_iota(jnp.int32, o.shape, dimension=1)
    is_logit = lane < num_actions

    # Numerically-stable masked softmax over the first `num_actions` lanes.
    logits = jnp.where(is_logit, o, -jnp.inf)
    m = jnp.max(logits, axis=-1, keepdims=True)
    e = jnp.exp(logits - m)                        # exactly 0 on masked lanes
    denom = jnp.sum(e, axis=-1, keepdims=True)
    probs = e * pl.reciprocal(denom, approx=True)

    # Lane-dense packed output: probs in lanes [0, A), value at lane A, 0 after.
    out_ref[...] = jnp.where(lane == num_actions, o, probs)


def pack_params(params):
    """One-time fusion/packing of per-head weights for the fused kernel."""
    S, H = params["p_h2_w"].shape
    A = params["p_outs_w"].shape[1]
    assert A + 1 <= OUT_LANES

    # Fused hidden weights / biases: (S, 2H), (1, 2H).
    wh = jnp.concatenate([params["p_h2_w"], params["v_h2_w"]], axis=1)
    bh = jnp.concatenate([params["p_h2_b"], params["v_h2_b"]], axis=1)

    # Fused block-diagonal, lane-padded output weights / biases.
    wo = jnp.zeros((2 * H, OUT_LANES), jnp.float32)
    wo = wo.at[:H, :A].set(params["p_outs_w"])
    wo = wo.at[H:, A].set(params["v_outs_w"][:, 0])
    bo = jnp.zeros((1, OUT_LANES), jnp.float32)
    bo = bo.at[:, :A].set(params["p_outs_b"])
    bo = bo.at[:, A].set(params["v_outs_b"][0, 0])

    return {
        "wh": wh.astype(jnp.bfloat16),   # bf16 MXU inputs
        "bh": bh.astype(jnp.float32),    # f32 bias add
        "wo": wo.astype(jnp.bfloat16),
        "bo": bo.astype(jnp.float32),
        "num_states": S,
        "num_hidden": H,
        "num_actions": A,
    }


def actor_critic_forward(x, packed):
    """x: (B, num_states) float32. Returns (probs (B, A), values (B, 1))."""
    B, S = x.shape
    H = packed["num_hidden"]
    A = packed["num_actions"]
    assert S == packed["num_states"]

    # Batch tiling: pad B to a multiple of the (sublane-aligned) batch tile.
    B8 = ((B + 7) // 8) * 8
    TB = min(512, B8)
    B_pad = ((B8 + TB - 1) // TB) * TB

    x_bf = x.astype(jnp.bfloat16)
    if B_pad != B:
        x_bf = jnp.pad(x_bf, ((0, B_pad - B), (0, 0)))

    out = pl.pallas_call(
        functools.partial(_ac_fused_kernel, num_actions=A),
        out_shape=jax.ShapeDtypeStruct((B_pad, OUT_LANES), jnp.float32),
        grid_spec=pltpu.PrefetchScalarGridSpec(
            num_scalar_prefetch=0,
            grid=(B_pad // TB,),
            in_specs=[
                pl.BlockSpec((TB, S), lambda i: (i, 0)),            # x tile
                pl.BlockSpec((S, 2 * H), lambda i: (0, 0)),         # wh resident
                pl.BlockSpec((1, 2 * H), lambda i: (0, 0)),         # bh resident
                pl.BlockSpec((2 * H, OUT_LANES), lambda i: (0, 0)),  # wo resident
                pl.BlockSpec((1, OUT_LANES), lambda i: (0, 0)),      # bo resident
            ],
            out_specs=pl.BlockSpec((TB, OUT_LANES), lambda i: (i, 0)),
        ),
        compiler_params=pltpu.CompilerParams(
            dimension_semantics=("parallel",)),   # v7x: split batch over 2 TCs
    )(x_bf, packed["wh"], packed["bh"], packed["wo"], packed["bo"])

    probs = out[:B, :A]
    values = out[:B, A:A + 1]
    return probs, values


def init_params(key, num_states, num_actions, num_units=128):
    """Deterministic init matching the nn.Linear shapes (stored as (in, out))."""
    ks = jax.random.split(key, 12)

    def lin(kw, kb, fan_in, fan_out):
        bound = 1.0 / jnp.sqrt(fan_in)
        w = jax.random.uniform(kw, (fan_in, fan_out), jnp.float32, -bound, bound)
        b = jax.random.uniform(kb, (1, fan_out), jnp.float32, -bound, bound)
        return w, b

    params = {}
    # p_h1 / v_h1 exist in the module but are dead code in forward(); created
    # here only for shape fidelity.
    params["p_h1_w"], params["p_h1_b"] = lin(ks[0], ks[1], num_states, num_units)
    params["p_h2_w"], params["p_h2_b"] = lin(ks[2], ks[3], num_states, num_units)
    params["p_outs_w"], params["p_outs_b"] = lin(ks[4], ks[5], num_units, num_actions)
    params["v_h1_w"], params["v_h1_b"] = lin(ks[6], ks[7], num_states, num_units)
    params["v_h2_w"], params["v_h2_b"] = lin(ks[8], ks[9], num_states, num_units)
    params["v_outs_w"], params["v_outs_b"] = lin(ks[10], ks[11], num_units, 1)
    return params


def _reference_forward(x, p):
    hp = jnp.maximum(x @ p["p_h2_w"] + p["p_h2_b"], 0.0)
    probs = jax.nn.softmax(hp @ p["p_outs_w"] + p["p_outs_b"], axis=-1)
    hv = jnp.maximum(x @ p["v_h2_w"] + p["v_h2_b"], 0.0)
    vals = hv @ p["v_outs_w"] + p["v_outs_b"]
    return probs, vals


if __name__ == "__main__":
    num_states, num_actions, batch = 32, 8, 2
    key = jax.random.PRNGKey(0)
    k_param, k_x = jax.random.split(key)

    params = init_params(k_param, num_states, num_actions)
    x = jax.random.normal(k_x, (batch, num_states), jnp.float32)

    packed = pack_params(params)   # pack once; reuse across rollout steps
    probs, values = jax.block_until_ready(actor_critic_forward(x, packed))

    # Sanity check against pure-JAX f32 reference (bf16 MXU path -> loosened
    # tolerances).
    ref_p, ref_v = _reference_forward(x, params)
    assert probs.shape == (batch, num_actions)
    assert values.shape == (batch, 1)
    assert jnp.allclose(probs, ref_p, atol=3e-2, rtol=3e-2)
    assert jnp.allclose(values, ref_v, atol=3e-2, rtol=3e-2)
    assert jnp.allclose(jnp.sum(probs, axis=-1), 1.0, atol=1e-2)

    print("KERNEL_OK")
</pallas_src>

<mosaic_0001>
module attributes {stable_mosaic.version = 11 : i64} {
  func.func @_ac_fused_kernel(%arg0: i32, %arg1: memref<8x32xbf16, #tpu.memory_space<vmem>>, %arg2: memref<32x256xbf16, #tpu.memory_space<vmem>>, %arg3: memref<1x256xf32, #tpu.memory_space<vmem>>, %arg4: memref<256x128xbf16, #tpu.memory_space<vmem>>, %arg5: memref<1x128xf32, #tpu.memory_space<vmem>>, %arg6: memref<8x128xf32, #tpu.memory_space<vmem>>) attributes {dimension_semantics = [#tpu.dimension_semantics<parallel>], iteration_bounds = array<i64: 1>, scalar_prefetch = 0 : i64, scratch_operands = 0 : i64, tpu.core_type = #tpu.core_type<tc>, window_params = [{transform_indices = @transform_0, window_bounds = array<i64: 8, 32>}, {pipeline_mode = #tpu.pipeline_mode<synchronous>, transform_indices = @transform_1, window_bounds = array<i64: 32, 256>}, {pipeline_mode = #tpu.pipeline_mode<synchronous>, transform_indices = @transform_2, window_bounds = array<i64: 1, 256>}, {pipeline_mode = #tpu.pipeline_mode<synchronous>, transform_indices = @transform_3, window_bounds = array<i64: 256, 128>}, {pipeline_mode = #tpu.pipeline_mode<synchronous>, transform_indices = @transform_4, window_bounds = array<i64: 1, 128>}, {transform_indices = @transform_5, window_bounds = array<i64: 8, 128>}]} {
    %c0 = arith.constant 0 : index
    %c0_0 = arith.constant 0 : index
    %0 = vector.load %arg1[%c0, %c0_0] : memref<8x32xbf16, #tpu.memory_space<vmem>>, vector<8x32xbf16>
    %c0_1 = arith.constant 0 : index
    %c0_2 = arith.constant 0 : index
    %1 = vector.load %arg2[%c0_1, %c0_2] : memref<32x256xbf16, #tpu.memory_space<vmem>>, vector<32x256xbf16>
    %cst = arith.constant dense<0.000000e+00> : vector<8x256xf32>
    %2 = tpu.matmul %0, %1, %cst {dimension_numbers = #tpu.dot_dimension_numbers<[1], [0], [0], [1], [0, 0, 1, 1], [], []>} : vector<8x32xbf16>, vector<32x256xbf16>, vector<8x256xf32> -> vector<8x256xf32>
    %c0_3 = arith.constant 0 : index
    %c0_4 = arith.constant 0 : index
    %3 = vector.load %arg3[%c0_3, %c0_4] : memref<1x256xf32, #tpu.memory_space<vmem>>, vector<1x256xf32>
    %4 = vector.broadcast %3 : vector<1x256xf32> to vector<8x256xf32>
    %5 = arith.addf %2, %4 : vector<8x256xf32>
    %cst_5 = arith.constant 0.000000e+00 : f32
    %6 = vector.broadcast %cst_5 : f32 to vector<8x256xf32>
    %7 = arith.maximumf %5, %6 : vector<8x256xf32>
    %8 = arith.truncf %7 : vector<8x256xf32> to vector<8x256xbf16>
    %c0_6 = arith.constant 0 : index
    %c0_7 = arith.constant 0 : index
    %9 = vector.load %arg4[%c0_6, %c0_7] : memref<256x128xbf16, #tpu.memory_space<vmem>>, vector<256x128xbf16>
    %cst_8 = arith.constant dense<0.000000e+00> : vector<8x128xf32>
    %10 = tpu.matmul %8, %9, %cst_8 {dimension_numbers = #tpu.dot_dimension_numbers<[1], [0], [0], [1], [0, 0, 1, 1], [], []>} : vector<8x256xbf16>, vector<256x128xbf16>, vector<8x128xf32> -> vector<8x128xf32>
    %c0_9 = arith.constant 0 : index
    %c0_10 = arith.constant 0 : index
    %11 = vector.load %arg5[%c0_9, %c0_10] : memref<1x128xf32, #tpu.memory_space<vmem>>, vector<1x128xf32>
    %12 = vector.broadcast %11 : vector<1x128xf32> to vector<8x128xf32>
    %13 = arith.addf %10, %12 : vector<8x128xf32>
    %14 = tpu.iota {dimensions = array<i32: 1>} : vector<8x128xi32>
    %c8_i32 = arith.constant 8 : i32
    %15 = vector.broadcast %c8_i32 : i32 to vector<8x128xi32>
    %16 = arith.cmpi slt, %14, %15 : vector<8x128xi32>
    %cst_11 = arith.constant 0xFF800000 : f32
    %17 = vector.broadcast %cst_11 : f32 to vector<8x128xf32>
    %18 = arith.select %16, %13, %17 : vector<8x128xi1>, vector<8x128xf32>
    %cst_12 = arith.constant dense<0xFF800000> : vector<8xf32>
    %19 = vector.multi_reduction <maximumf>, %18, %cst_12 [1] : vector<8x128xf32> to vector<8xf32>
    %20 = vector.shape_cast %19 : vector<8xf32> to vector<8x1xf32>
    %21 = vector.broadcast %20 : vector<8x1xf32> to vector<8x128xf32>
    %22 = arith.subf %18, %21 : vector<8x128xf32>
    %23 = math.exp %22 : vector<8x128xf32>
    %cst_13 = arith.constant dense<0.000000e+00> : vector<8xf32>
    %24 = vector.multi_reduction <add>, %23, %cst_13 [1] : vector<8x128xf32> to vector<8xf32>
    %25 = vector.shape_cast %24 : vector<8xf32> to vector<8x1xf32>
    %26 = tpu.reciprocal %25 {approx = true} : vector<8x1xf32> -> vector<8x1xf32>
    %27 = vector.broadcast %26 : vector<8x1xf32> to vector<8x128xf32>
    %28 = arith.mulf %23, %27 : vector<8x128xf32>
    %c8_i32_14 = arith.constant 8 : i32
    %29 = vector.broadcast %c8_i32_14 : i32 to vector<8x128xi32>
    %30 = arith.cmpi eq, %14, %29 : vector<8x128xi32>
    %31 = arith.select %30, %13, %28 : vector<8x128xi1>, vector<8x128xf32>
    %c0_15 = arith.constant 0 : index
    %c0_16 = arith.constant 0 : index
    %32 = vector.load %arg6[%c0_15, %c0_16] : memref<8x128xf32, #tpu.memory_space<vmem>>, vector<8x128xf32>
    tpu.vector_store %arg6[%c0_15, %c0_16], %31 {strides = array<i32>} : memref<8x128xf32, #tpu.memory_space<vmem>>, vector<8x128xf32>,
    return
  }
  func.func @transform_0(%arg0: i32) -> (i32, i32) {
    %c0_i32 = arith.constant 0 : i32
    %c0_i32_0 = arith.constant 0 : i32
    return %arg0, %c0_i32 : i32, i32
  }
  func.func @transform_1(%arg0: i32) -> (i32, i32) {
    %c0_i32 = arith.constant 0 : i32
    %c0_i32_0 = arith.constant 0 : i32
    %c0_i32_1 = arith.constant 0 : i32
    return %c0_i32, %c0_i32_0 : i32, i32
  }
  func.func @transform_2(%arg0: i32) -> (i32, i32) {
    %c0_i32 = arith.constant 0 : i32
    %c0_i32_0 = arith.constant 0 : i32
    %c0_i32_1 = arith.constant 0 : i32
    return %c0_i32, %c0_i32_0 : i32, i32
  }
  func.func @transform_3(%arg0: i32) -> (i32, i32) {
    %c0_i32 = arith.constant 0 : i32
    %c0_i32_0 = arith.constant 0 : i32
    %c0_i32_1 = arith.constant 0 : i32
    return %c0_i32, %c0_i32_0 : i32, i32
  }
  func.func @transform_4(%arg0: i32) -> (i32, i32) {
    %c0_i32 = arith.constant 0 : i32
    %c0_i32_0 = arith.constant 0 : i32
    %c0_i32_1 = arith.constant 0 : i32
    return %c0_i32, %c0_i32_0 : i32, i32
  }
  func.func @transform_5(%arg0: i32) -> (i32, i32) {
    %c0_i32 = arith.constant 0 : i32
    %c0_i32_0 = arith.constant 0 : i32
    return %arg0, %c0_i32 : i32, i32
  }
}

</mosaic_0001>

<llo_original>
// kernel: tpu_custom_call.1
$region0: #{tpu_custom_call.1}
  #allocation0 [shape = 'u32[]', space=smem, size = 0x4, offset = 0x4, fixed_abs, tag = 'smem constant byte address 0x4 - core index']
  #allocation1 [shape = 'u32[144,128]{1,0:T(1,128)}', space=vmem, size = 0x12000, scoped, tag = 'internal scratch']
  %s0 = inlined_call_operand.hbm [shape: bf16[8,32], index: 0, kind: input, shape index: {}]
  %s1 = inlined_call_operand.hbm [shape: bf16[32,256], index: 1, kind: input, shape index: {}]
  %s2 = inlined_call_operand.vmem [shape: f32[1,256], index: 2, kind: input, shape index: {}]
  %s3 = inlined_call_operand.hbm [shape: bf16[256,128], index: 3, kind: input, shape index: {}]
  %s4 = inlined_call_operand.vmem [shape: f32[1,128], index: 4, kind: input, shape index: {}]
  %s5 = inlined_call_operand.hbm [shape: f32[8,128], index: 5, kind: output, shape index: {}]
  %s6 = sld [smem:[#allocation0]]
  $region42: #{tpu_custom_call.1} parent=0
    _
  %s8 = ssub.s32 1, %s6
  %s9 = scalar_select 0, %s8, %s6
  $region1: #{tpu_custom_call.1} parent=0
    #allocation2 [shape = 'u8[2048]{0}', space=vmem, size = 0x800, scoped, tag = 'input window, operand 0, single buffered']
    #allocation3 [shape = 's32[1]{0}', space=sflag, size = 0x4, scoped, tag = 'scoped memory for tpu_custom_call.1']
    #allocation4 [shape = 's32[1]{0}', space=sflag, size = 0x4, scoped, tag = 'scoped memory for tpu_custom_call.1']
    #allocation5 [shape = 'u8[16384]{0}', space=vmem, size = 0x4000, scoped, tag = 'input window, operand 1, single buffered']
    #allocation6 [shape = 's32[1]{0}', space=sflag, size = 0x4, scoped, tag = 'scoped memory for tpu_custom_call.1']
    #allocation7 [shape = 'u8[65536]{0}', space=vmem, size = 0x10000, scoped, tag = 'input window, operand 3, single buffered']
    #allocation8 [shape = 'u8[4096]{0}', space=vmem, size = 0x1000, scoped, tag = 'output window, operand 0, single buffered']
    %10 = vsyncpa [#allocation3], 0
    %11 = vsyncpa [#allocation6], 0
    %12 = vsyncpa [#allocation4], 0
    // Predicated region
    $region2: #{tpu_custom_call.1} parent=1 // pred_check
      _
    $region3: #{tpu_custom_call.1} parent=1 // pred_check_branch
      %14 = sbr.rel (0) target = $region5
    $region4: #{tpu_custom_call.1} parent=1 // pred_region
      %s16 = ssub.s32 64, 64
      %17 = vsyncadd [#allocation3], %s16
      %s19 = sshll.u32 [#allocation2], 4
      %s20 = int_to_ptr.vmem [resolvable:$true] %s19
      %22 = dma.hbm_to_vmem [thread:$0]  %s0, 64, %s20, [#allocation3]
    $region5: #{tpu_custom_call.1} parent=1 // pred_fallthru
      _
    // Predicated region
    $region6: #{tpu_custom_call.1} parent=1 // pred_check
      _
    $region7: #{tpu_custom_call.1} parent=1 // pred_check_branch
      %24 = sbr.rel (0) target = $region9
    $region8: #{tpu_custom_call.1} parent=1 // pred_region
      %s26 = ssub.s32 512, 512
      %27 = vsyncadd [#allocation6], %s26
      %s28 = sshll.u32 [#allocation5], 4
      %s29 = int_to_ptr.vmem [resolvable:$true] %s28
      %34 = dma.hbm_to_vmem [thread:$0]  %s1, 512, %s29, [#allocation6], 128, 128, 8
    $region9: #{tpu_custom_call.1} parent=1 // pred_fallthru
      _
    // Predicated region
    $region10: #{tpu_custom_call.1} parent=1 // pred_check
      _
    $region11: #{tpu_custom_call.1} parent=1 // pred_check_branch
      %36 = sbr.rel (0) target = $region13
    $region12: #{tpu_custom_call.1} parent=1 // pred_region
      _
    $region13: #{tpu_custom_call.1} parent=1 // pred_fallthru
      _
    // Predicated region
    $region14: #{tpu_custom_call.1} parent=1 // pred_check
      _
    $region15: #{tpu_custom_call.1} parent=1 // pred_check_branch
      %38 = sbr.rel (0) target = $region17
    $region16: #{tpu_custom_call.1} parent=1 // pred_region
      %s40 = ssub.s32 2048, 2048
      %41 = vsyncadd [#allocation6], %s40
      %s42 = sshll.u32 [#allocation7], 4
      %s43 = int_to_ptr.vmem [resolvable:$true] %s42
      %48 = dma.hbm_to_vmem [thread:$0]  %s3, 2048, %s43, [#allocation6], 64, 64, 4
    $region17: #{tpu_custom_call.1} parent=1 // pred_fallthru
      _
    // Predicated region
    $region18: #{tpu_custom_call.1} parent=1 // pred_check
      _
    $region19: #{tpu_custom_call.1} parent=1 // pred_check_branch
      %50 = sbr.rel (0) target = $region21
    $region20: #{tpu_custom_call.1} parent=1 // pred_region
      _
    $region21: #{tpu_custom_call.1} parent=1 // pred_fallthru
      _
    // Predicated region
    $region22: #{tpu_custom_call.1} parent=1 // pred_check
      _
    $region23: #{tpu_custom_call.1} parent=1 // pred_check_branch
      %52 = sbr.rel (0) target = $region25
    $region24: #{tpu_custom_call.1} parent=1 // pred_region
      %53 = dma.done [#allocation3], 64
    $region25: #{tpu_custom_call.1} parent=1 // pred_fallthru
      _
    // Predicated region
    $region26: #{tpu_custom_call.1} parent=1 // pred_check
      _
    $region27: #{tpu_custom_call.1} parent=1 // pred_check_branch
      %55 = sbr.rel (0) target = $region29
    $region28: #{tpu_custom_call.1} parent=1 // pred_region
      %56 = dma.done [#allocation6], 512
    $region29: #{tpu_custom_call.1} parent=1 // pred_fallthru
      _
    // Predicated region
    $region30: #{tpu_custom_call.1} parent=1 // pred_check
      _
    $region31: #{tpu_custom_call.1} parent=1 // pred_check_branch
      %58 = sbr.rel (0) target = $region33
    $region32: #{tpu_custom_call.1} parent=1 // pred_region
      %59 = dma.done [#allocation6], 2048
    $region33: #{tpu_custom_call.1} parent=1 // pred_fallthru
      _
    %v61 = vld [vmem:[#allocation2] sm:$0xf]
    %v62 = vld [vmem:[#allocation5] sm:$0xff]
    %v63 = vld [vmem:[#allocation5 + $0x8] sm:$0xff]
    %v64 = vld [vmem:[#allocation5 + $0x10] sm:$0xff]
    %v65 = vld [vmem:[#allocation5 + $0x18] sm:$0xff]
    %v66 = vld [vmem:[%s2] sm:$0x3]
    %v68 = vlaneseq
    %v69 = vshrl.u32 %v68, 7
    %v70 = vsub.s32 0, %v69
    %v71 = vrot.slane %v66, %v70
    %v72 = vlaneseq
    %v73 = vshrl.u32 %v72, 7
    %v74 = vsub.s32 1, %v73
    %v75 = vrot.slane %v66, %v74
    %v82 = vunpack.c.l.b16 %v62
    %v83 = vunpack.c.h.b16 %v62
    %v84 = vunpack.c.l.b16 %v63
    %v85 = vunpack.c.h.b16 %v63
    %v86 = vunpack.c.l.b16 %v64
    %v87 = vunpack.c.h.b16 %v64
    %v88 = vunpack.c.l.b16 %v65
    %v89 = vunpack.c.h.b16 %v65
    %v90 = vpack.c.b16 %v84, %v82
    %v91 = vpack.c.b16 %v85, %v83
    %v92 = vpack.c.b16 %v88, %v86
    %v93 = vpack.c.b16 %v89, %v87
    %vm98 = vcmask 261120
    %v100 = vsel %vm98, %v61, 0
    %102 = vmatprep.subr.bf16.mxu0 %v91
    %103 = vmatpush1.bf16.msra.mxu0 %v90
    %104 = vmatprep.subr.bf16.mxu0 %v93
    %105 = vmatpush1.bf16.msra.mxu0 %v92
    %106 = vmatprep.subr.bf16.mxu0 0
    %107 = vmatpush1.bf16.msra.mxu0 0
    %108 = vmatprep.subr.bf16.mxu0 0
    %109 = vmatpush1.bf16.msra.mxu0 0
    %110 = vmatprep.subr.bf16.mxu0 0
    %111 = vmatpush1.bf16.msra.mxu0 0
    %112 = vmatprep.subr.bf16.mxu0 0
    %113 = vmatpush1.bf16.msra.mxu0 0
    %114 = vmatprep.subr.bf16.mxu0 0
    %115 = vmatpush1.bf16.msra.mxu0 0
    %116 = vmatprep.subr.bf16.mxu0 0
    %117 = vmatpush1.bf16.msra.mxu0 0
    %118 = vmatprep.subr.bf16.mxu0 0
    %119 = vmatpush1.bf16.msra.mxu0 0
    %120 = vmatprep.subr.bf16.mxu0 0
    %121 = vmatpush1.bf16.msra.mxu0 0
    %122 = vmatprep.subr.bf16.mxu0 0
    %123 = vmatpush1.bf16.msra.mxu0 0
    %124 = vmatprep.subr.bf16.mxu0 0
    %125 = vmatpush1.bf16.msra.mxu0 0
    %126 = vmatprep.subr.bf16.mxu0 0
    %127 = vmatpush1.bf16.msra.mxu0 0
    %128 = vmatprep.subr.bf16.mxu0 0
    %129 = vmatpush1.bf16.msra.mxu0 0
    %130 = vmatprep.subr.bf16.mxu0 0
    %131 = vmatpush1.bf16.msra.mxu0 0
    %132 = vmatprep.subr.bf16.mxu0 0
    %133 = vmatpush1.bf16.msra.mxu0 0
    %134 = vmatprep.mubr.bf16.mxu0 0
    %135 = vmatmul.mubr.bf16.gmra.mrb[0].mxu0 %v100
    %v136 = vpop.f32.mrb[0].mxu0
    %v137 = vadd.f32 %v71, %v136
    %v138 = vpop.f32.mrb[0].mxu0
    %v139 = vadd.f32 %v75, %v138
    %v140 = vpop.f32.mrb[0].mxu0
    %v141 = vpop.f32.mrb[0].mxu0
    %142 = vdwg.mxu0
    %v143 = vmax.f32 %v137, 0.0
    %v144 = vmax.f32 %v139, 0.0
    %v145 = vpack.c.bf16 %v143, %v143
    %v146 = vpack.c.bf16 %v144, %v144
    %v147 = vld [vmem:[#allocation7] sm:$0xf]
    %v148 = vld [vmem:[#allocation7 + $0x4] sm:$0xf]
    %v149 = vld [vmem:[#allocation7 + $0x8] sm:$0xf]
    %v150 = vld [vmem:[#allocation7 + $0xc] sm:$0xf]
    %v151 = vld [vmem:[#allocation7 + $0x10] sm:$0xf]
    %v152 = vld [vmem:[#allocation7 + $0x14] sm:$0xf]
    %v153 = vld [vmem:[#allocation7 + $0x18] sm:$0xf]
    %v154 = vld [vmem:[#allocation7 + $0x1c] sm:$0xf]
    %v155 = vld [vmem:[#allocation7 + $0x20] sm:$0xf]
    %v156 = vld [vmem:[#allocation7 + $0x24] sm:$0xf]
    %v157 = vld [vmem:[#allocation7 + $0x28] sm:$0xf]
    %v158 = vld [vmem:[#allocation7 + $0x2c] sm:$0xf]
    %v159 = vld [vmem:[#allocation7 + $0x30] sm:$0xf]
    %v160 = vld [vmem:[#allocation7 + $0x34] sm:$0xf]
    %v161 = vld [vmem:[#allocation7 + $0x38] sm:$0xf]
    %v162 = vld [vmem:[#allocation7 + $0x3c] sm:$0xf]
    %v163 = vld [vmem:[#allocation7 + $0x40] sm:$0xf]
    %v164 = vld [vmem:[#allocation7 + $0x44] sm:$0xf]
    %v165 = vld [vmem:[#allocation7 + $0x48] sm:$0xf]
    %v166 = vld [vmem:[#allocation7 + $0x4c] sm:$0xf]
    %v167 = vld [vmem:[#allocation7 + $0x50] sm:$0xf]
    %v168 = vld [vmem:[#allocation7 + $0x54] sm:$0xf]
    %v169 = vld [vmem:[#allocation7 + $0x58] sm:$0xf]
    %v170 = vld [vmem:[#allocation7 + $0x5c] sm:$0xf]
    %v171 = vld [vmem:[#allocation7 + $0x60] sm:$0xf]
    %v172 = vld [vmem:[#allocation7 + $0x64] sm:$0xf]
    %v173 = vld [vmem:[#allocation7 + $0x68] sm:$0xf]
    %v174 = vld [vmem:[#allocation7 + $0x6c] sm:$0xf]
    %v175 = vld [vmem:[#allocation7 + $0x70] sm:$0xf]
    %v176 = vld [vmem:[#allocation7 + $0x74] sm:$0xf]
    %v177 = vld [vmem:[#allocation7 + $0x78] sm:$0xf]
    %v178 = vld [vmem:[#allocation7 + $0x7c] sm:$0xf]
    %v179 = vld [vmem:[%s4] sm:$0x1]
    %v181 = vlaneseq
    %v182 = vshrl.u32 %v181, 7
    %v183 = vsub.s32 0, %v182
    %v184 = vrot.slane %v179, %v183
    %v218 = vunpack.c.l.b16 %v147
    %v219 = vunpack.c.l.b16 %v148
    %v220 = vunpack.c.l.b16 %v149
    %v221 = vunpack.c.l.b16 %v150
    %v222 = vunpack.c.l.b16 %v151
    %v223 = vunpack.c.l.b16 %v152
    %v224 = vunpack.c.l.b16 %v153
    %v225 = vunpack.c.l.b16 %v154
    %v226 = vunpack.c.l.b16 %v155
    %v227 = vunpack.c.l.b16 %v156
    %v228 = vunpack.c.l.b16 %v157
    %v229 = vunpack.c.l.b16 %v158
    %v230 = vunpack.c.l.b16 %v159
    %v231 = vunpack.c.l.b16 %v160
    %v232 = vunpack.c.l.b16 %v161
    %v233 = vunpack.c.l.b16 %v162
    %v234 = vunpack.c.l.b16 %v163
    %v235 = vunpack.c.l.b16 %v164
    %v236 = vunpack.c.l.b16 %v165
    %v237 = vunpack.c.l.b16 %v166
    %v238 = vunpack.c.l.b16 %v167
    %v239 = vunpack.c.l.b16 %v168
    %v240 = vunpack.c.l.b16 %v169
    %v241 = vunpack.c.l.b16 %v170
    %v242 = vunpack.c.l.b16 %v171
    %v243 = vunpack.c.l.b16 %v172
    %v244 = vunpack.c.l.b16 %v173
    %v245 = vunpack.c.l.b16 %v174
    %v246 = vunpack.c.l.b16 %v175
    %v247 = vunpack.c.l.b16 %v176
    %v248 = vunpack.c.l.b16 %v177
    %v249 = vunpack.c.l.b16 %v178
    %v250 = vpack.c.b16 %v219, %v218
    %v251 = vpack.c.b16 %v221, %v220
    %v252 = vpack.c.b16 %v223, %v222
    %v253 = vpack.c.b16 %v225, %v224
    %v254 = vpack.c.b16 %v227, %v226
    %v255 = vpack.c.b16 %v229, %v228
    %v256 = vpack.c.b16 %v231, %v230
    %v257 = vpack.c.b16 %v233, %v232
    %v258 = vpack.c.b16 %v235, %v234
    %v259 = vpack.c.b16 %v237, %v236
    %v260 = vpack.c.b16 %v239, %v238
    %v261 = vpack.c.b16 %v241, %v240
    %v262 = vpack.c.b16 %v243, %v242
    %v263 = vpack.c.b16 %v245, %v244
    %v264 = vpack.c.b16 %v247, %v246
    %v265 = vpack.c.b16 %v249, %v248
    %282 = vmatprep.subr.bf16.mxu0 0
    %283 = vmatpush1.bf16.msra.mxu0 %v250
    %284 = vmatprep.subr.bf16.mxu0 0
    %285 = vmatpush1.bf16.msra.mxu0 %v251
    %286 = vmatprep.subr.bf16.mxu0 0
    %287 = vmatpush1.bf16.msra.mxu0 %v252
    %288 = vmatprep.subr.bf16.mxu0 0
    %289 = vmatpush1.bf16.msra.mxu0 %v253
    %290 = vmatprep.subr.bf16.mxu0 0
    %291 = vmatpush1.bf16.msra.mxu0 %v254
    %292 = vmatprep.subr.bf16.mxu0 0
    %293 = vmatpush1.bf16.msra.mxu0 %v255
    %294 = vmatprep.subr.bf16.mxu0 0
    %295 = vmatpush1.bf16.msra.mxu0 %v256
    %296 = vmatprep.subr.bf16.mxu0 0
    %297 = vmatpush1.bf16.msra.mxu0 %v257
    %298 = vmatprep.subr.bf16.mxu0 0
    %299 = vmatpush1.bf16.msra.mxu0 %v258
    %300 = vmatprep.subr.bf16.mxu0 0
    %301 = vmatpush1.bf16.msra.mxu0 %v259
    %302 = vmatprep.subr.bf16.mxu0 0
    %303 = vmatpush1.bf16.msra.mxu0 %v260
    %304 = vmatprep.subr.bf16.mxu0 0
    %305 = vmatpush1.bf16.msra.mxu0 %v261
    %306 = vmatprep.subr.bf16.mxu0 0
    %307 = vmatpush1.bf16.msra.mxu0 %v262
    %308 = vmatprep.subr.bf16.mxu0 0
    %309 = vmatpush1.bf16.msra.mxu0 %v263
    %310 = vmatprep.subr.bf16.mxu0 0
    %311 = vmatpush1.bf16.msra.mxu0 %v264
    %312 = vmatprep.subr.bf16.mxu0 0
    %313 = vmatpush1.bf16.msra.mxu0 %v265
    %314 = vmatprep.mubr.bf16.mxu0 %v146
    %315 = vmatmul.mubr.bf16.gmra.mrb[0].mxu0 %v145
    %v316 = vpop.f32.mrb[0].mxu0
    %v317 = vadd.f32 %v184, %v316
    %v318 = vpop.f32.mrb[0].mxu0
    %v319 = vpop.f32.mrb[0].mxu0
    %v320 = vpop.f32.mrb[0].mxu0
    %321 = vdwg.mxu0
    %v322 = vlaneseq
    %v323 = vand.u32 %v322, 127
    %vm324 = vcmp.lt.s32.totalorder %v323, 8
    %v325 = vsel %vm324, %v317, -inf
    %326 = vmax.xlane.f32.xlu0 %v325
    %v327 = vpop.xlane.xlu0 %326
    %v328 = vsub.f32 %v325, %v327
    %v329 = vmul.f32 %v328, 1.442695
    %v330 = vpow.pop %v329
    %331 = vadd.xlane.f32.xlu0 %v330
    %v332 = vpop.xlane.xlu0 %331
    %v333 = vrcp.pop %v332
    %v334 = vmul.f32 %v330, %v333
    %vm335 = vcmp.eq.s32.totalorder %v323, 8
    %v336 = vsel %vm335, %v317, %v334
    %337 = vst [vmem:[#allocation8] sm:$0xff] %v336
    // Predicated region
    $region34: #{tpu_custom_call.1} parent=1 // pred_check
      _
    $region35: #{tpu_custom_call.1} parent=1 // pred_check_branch
      %339 = sbr.rel (0) target = $region37
    $region36: #{tpu_custom_call.1} parent=1 // pred_region
      %s341 = ssub.s32 128, 128
      %342 = vsyncadd [#allocation4], %s341
      %s344 = sshll.u32 [#allocation8], 4
      %s345 = int_to_ptr.vmem [resolvable:$true] %s344
      %347 = dma.vmem_to_hbm [thread:$0]  %s345, 128, %s5, [#allocation4]
    $region37: #{tpu_custom_call.1} parent=1 // pred_fallthru
      _
    // Predicated region
    $region38: #{tpu_custom_call.1} parent=1 // pred_check
      _
    $region39: #{tpu_custom_call.1} parent=1 // pred_check_branch
      %349 = sbr.rel (0) target = $region41
    $region40: #{tpu_custom_call.1} parent=1 // pred_region
      %350 = dma.done [#allocation4], 128
    $region41: #{tpu_custom_call.1} parent=1 // pred_fallthru
      _
    %351 = vsyncpa [#allocation3], 1
    %352 = vsyncpa [#allocation6], 1
    %353 = vsyncpa [#allocation4], 1

</llo_original>
